<compile_context>
chip_gen: v6e
topology: v6e:2x2x1
jax: 0.10.0
libtpu: 0.0.40
codegen_flags: <defaults>
</compile_context>

<pallas_src>
import functools

import jax
import jax.numpy as jnp
from jax.experimental import pallas as pl
from jax.experimental.pallas import tpu as pltpu


def _round_up(x: int, m: int) -> int:
    return (x + m - 1) // m * m


def _vmem_capacity() -> int:
    """Per-core VMEM bytes; conservative fallback if the query is unavailable."""
    try:
        cap = getattr(pltpu.get_tpu_info(), "vmem_capacity_bytes", None)
        if cap:
            return int(cap)
    except Exception:
        pass
    return 64 << 20  # v7x per-TensorCore VMEM (safe lower bound)


def _tc_per_chip() -> int:
    """2 TensorCores per chip on v7x; 1 on v5e/v6e."""
    try:
        kind = jax.devices()[0].device_kind.lower()
    except Exception:
        return 1
    return 2 if "v7" in kind else 1


def _default_hidden_pad() -> int:
    """MXU tile: 256 lanes on v6e/v7x, 128 on v5e."""
    try:
        kind = jax.devices()[0].device_kind.lower()
    except Exception:
        return 128
    return 256 if ("v6" in kind or "v7" in kind) else 128


def _choose_chunk(hidden_p: int) -> int:
    """Column-panel width for the fused layer-2+3 loop (lane-aligned)."""
    if hidden_p <= 512:
        return hidden_p
    for c in (512, 384, 256, 128):
        if hidden_p % c == 0:
            return c
    return hidden_p


def _resident_bytes(obs_dim: int, hidden_p: int) -> int:
    """Single-buffered (Buffered(1)) weight/bias VMEM footprint."""
    return (obs_dim * hidden_p * 2          # w1 bf16
            + hidden_p * hidden_p * 2       # w2 bf16
            + 3 * 8 * hidden_p * 4)         # b1, b2, w3 rows (sublane-padded) f32


def _per_row_bytes(obs_dim: int, hidden_p: int, chunk: int) -> int:
    """Batch-dependent VMEM bytes per row of the batch tile."""
    return (2 * _round_up(obs_dim, 128) * 4   # double-buffered f32 obs tile
            + hidden_p * (4 + 2)              # h1 f32 + bf16 staging
            + chunk * (4 + 2)                 # h2 chunk f32 + staging
            + 2 * 128 * 4)                    # double-buffered (lane-padded) out tile


def _choose_block_b(B: int, obs_dim: int, hidden_p: int, chunk: int) -> int:
    """Batch tile: sublane-aligned, capacity- and weight-aware, no forced split
    on single-TensorCore parts."""
    sub = 8                                     # f32 obs tile sublane packing
    cap = int(_vmem_capacity() * 0.8)
    per_row = _per_row_bytes(obs_dim, hidden_p, chunk)
    budget = max(sub * per_row, cap - _resident_bytes(obs_dim, hidden_p))
    bb = min(1024, budget // per_row, B)
    # Only split the batch across grid steps when there is a 2nd TensorCore
    # (v7x) AND each half is big enough to dominate the ~0.35 us/step cost.
    if _tc_per_chip() > 1 and B >= 512:
        bb = min(bb, _round_up(pl.cdiv(B, 2), sub))
    if bb >= B:
        return B                                # one full tile (full-dim exempt)
    return max(sub, (int(bb) // sub) * sub)


def _vmem_limit_bytes(block_b: int, obs_dim: int, hidden_p: int, chunk: int) -> int:
    """Scoped-VMEM limit sized from the actual buffers, capped per generation."""
    cap = _vmem_capacity()
    o = _round_up(obs_dim, 128)
    need = _resident_bytes(obs_dim, hidden_p)   # single-buffered weights/biases
    need += 2 * block_b * o * 4                 # obs tiles (x2 pipeline buffers)
    need += 2 * block_b * 128 * 4               # out tiles (lane-padded, x2)
    need += block_b * hidden_p * (4 + 2)        # h1 f32 + bf16 staging
    need += block_b * chunk * (4 + 2)           # h2 chunk f32 + staging
    return int(min(int(cap * 0.85), max(need * 3 // 2 + (2 << 20), 8 << 20)))


def _mlp_critic_kernel(obs_ref, w1_ref, b1_ref, w2_ref, b2_ref, w3_ref, b3_ref,
                       out_ref, *, chunk):
    """Fused 3-layer MLP critic on one (block_b, obs_dim) batch tile.

    obs_ref: f32 (cast to bf16 in-kernel).  w1/w2: bf16 MXU operands.
    b1/b2/w3: f32 rows.  b3: SMEM (1,1) f32 scalar.  out_ref: (block_b, 1) f32.
    """
    # Cast the streamed f32 obs on the VPU (hidden under the MXU work).
    x = obs_ref[...].astype(w1_ref.dtype)                          # (TB, O) bf16

    # Layer 1: bf16 MXU matmul, f32 accumulate, f32 bias + ReLU.
    h1 = jnp.dot(x, w1_ref[...], preferred_element_type=jnp.float32)
    h1 = jnp.maximum(h1 + b1_ref[...], 0.0)                        # (TB, Hp) f32
    h1c = h1.astype(w2_ref.dtype)                                  # bf16 for MXU

    # Layers 2 + 3 fused over column panels of w2: the full (TB, Hp) h2 is
    # never materialized.  The out_features=1 head is a VPU multiply + XLU
    # lane reduction (kept off the MXU); w3 stays f32.
    hp = w2_ref.shape[1]
    v = jnp.zeros((x.shape[0], 1), jnp.float32)
    for c0 in range(0, hp, chunk):                                 # static loop
        h2_c = jnp.dot(h1c, w2_ref[:, c0:c0 + chunk],
                       preferred_element_type=jnp.float32)
        h2_c = jnp.maximum(h2_c + b2_ref[:, c0:c0 + chunk], 0.0)
        v = v + jnp.sum(h2_c * w3_ref[:, c0:c0 + chunk],
                        axis=-1, keepdims=True)

    out_ref[...] = (v + b3_ref[0, 0]).astype(out_ref.dtype)


@functools.partial(jax.jit, static_argnames=("block_b",))
def mlp_critic_forward(obs, prepared, *, block_b=None):
    """Pallas forward pass for MLPCritic. Returns (B,) state values (f32).

    `prepared` must come from `prepare_params` (bf16 weights, padded hidden),
    so no dtype casts or weight re-streaming happen per call.
    """
    B, obs_dim = obs.shape
    hidden_p = prepared["w1"].shape[1]
    chunk = _choose_chunk(hidden_p)
    if block_b is None:
        block_b = _choose_block_b(B, obs_dim, hidden_p, chunk)
    grid = (pl.cdiv(B, block_b),)

    inv = lambda i: (0, 0)          # grid-invariant (resident) blocks
    single = pl.Buffered(1)         # constant index_map -> no double buffering

    out = pl.pallas_call(
        functools.partial(_mlp_critic_kernel, chunk=chunk),
        out_shape=jax.ShapeDtypeStruct((B, 1), jnp.float32),
        grid_spec=pltpu.PrefetchScalarGridSpec(
            num_scalar_prefetch=0,
            grid=grid,
            in_specs=[
                pl.BlockSpec((block_b, obs_dim), lambda i: (i, 0)),            # obs (f32)
                pl.BlockSpec((obs_dim, hidden_p), inv, pipeline_mode=single),  # w1 bf16
                pl.BlockSpec((1, hidden_p), inv, pipeline_mode=single),        # b1 f32
                pl.BlockSpec((hidden_p, hidden_p), inv, pipeline_mode=single), # w2 bf16
                pl.BlockSpec((1, hidden_p), inv, pipeline_mode=single),        # b2 f32
                pl.BlockSpec((1, hidden_p), inv, pipeline_mode=single),        # w3 f32 row
                pl.BlockSpec(memory_space=pltpu.MemorySpace.SMEM),             # b3 scalar
            ],
            out_specs=pl.BlockSpec((block_b, 1), lambda i: (i, 0)),
        ),
        compiler_params=pltpu.CompilerParams(
            dimension_semantics=("parallel",),
            vmem_limit_bytes=_vmem_limit_bytes(block_b, obs_dim, hidden_p, chunk),
        ),
    )(obs, prepared["w1"], prepared["b1"], prepared["w2"], prepared["b2"],
      prepared["w3"], prepared["b3"])

    # .squeeze(-1) from the PyTorch module
    return out[:, 0]


def init_params(key, obs_dim, hidden_dim):
    """Deterministic synthetic parameters (PyTorch-like uniform fan-in init).

    Weights are stored transposed vs PyTorch, i.e. (in, out)."""
    ks = jax.random.split(key, 6)

    def uniform(k, shape, fan_in):
        bound = 1.0 / jnp.sqrt(fan_in)
        return jax.random.uniform(k, shape, jnp.float32, -bound, bound)

    return {
        "w1": uniform(ks[0], (obs_dim, hidden_dim), obs_dim),
        "b1": uniform(ks[1], (1, hidden_dim), obs_dim),
        "w2": uniform(ks[2], (hidden_dim, hidden_dim), hidden_dim),
        "b2": uniform(ks[3], (1, hidden_dim), hidden_dim),
        "w3": uniform(ks[4], (hidden_dim, 1), hidden_dim),
        "b3": uniform(ks[5], (1, 1), hidden_dim),
    }


def prepare_params(params, *, compute_dtype=jnp.bfloat16, pad_hidden_to=None):
    """One-time parameter layout (run OUTSIDE the jitted forward):
      - zero-pad hidden_dim to a multiple of the MXU tile (128 v5e / 256 v6e,v7x),
      - cast the GEMM weights (w1, w2) to bf16 once,
      - keep biases and the value-head row (w3) in f32 (off the MXU).
    Zero padding is exact: padded units are ReLU(0)=0 with zero output weight.
    obs_dim is deliberately NOT padded."""
    if pad_hidden_to is None:
        pad_hidden_to = _default_hidden_pad()
    h = params["w1"].shape[1]
    hp = _round_up(h, pad_hidden_to)
    ph = hp - h

    def pad(x, pads):
        return jnp.pad(x, pads) if any(p[1] for p in pads) else x

    w1 = pad(params["w1"].astype(jnp.float32), ((0, 0), (0, ph)))
    b1 = pad(params["b1"].reshape(1, h).astype(jnp.float32), ((0, 0), (0, ph)))
    w2 = pad(params["w2"].astype(jnp.float32), ((0, ph), (0, ph)))
    b2 = pad(params["b2"].reshape(1, h).astype(jnp.float32), ((0, 0), (0, ph)))
    w3 = pad(params["w3"].reshape(1, h).astype(jnp.float32), ((0, 0), (0, ph)))
    b3 = params["b3"].reshape(1, 1).astype(jnp.float32)
    return {
        "w1": w1.astype(compute_dtype),   # bf16 MXU operand
        "b1": b1,                         # f32
        "w2": w2.astype(compute_dtype),   # bf16 MXU operand
        "b2": b2,                         # f32
        "w3": w3,                         # f32 value-head row (never on the MXU)
        "b3": b3,                         # f32 scalar (SMEM)
    }


def _reference_forward(obs, params, compute_dtype=jnp.bfloat16):
    """Pure-JAX reference mirroring the kernel's bf16-compute / f32-accumulate."""
    cd = compute_dtype
    h1 = jnp.maximum(
        jnp.dot(obs.astype(cd), params["w1"].astype(cd),
                preferred_element_type=jnp.float32)
        + params["b1"].reshape(1, -1).astype(jnp.float32), 0.0)
    h2 = jnp.maximum(
        jnp.dot(h1.astype(cd), params["w2"].astype(cd),
                preferred_element_type=jnp.float32)
        + params["b2"].reshape(1, -1).astype(jnp.float32), 0.0)
    v = h2 @ params["w3"].astype(jnp.float32) + params["b3"].reshape(1, 1).astype(jnp.float32)
    return v[:, 0]


if __name__ == "__main__":
    key = jax.random.PRNGKey(0)
    k_obs, k_par, k_obs2 = jax.random.split(key, 3)

    batch, obs_dim, hidden_dim = 192, 16, 32
    obs = jax.random.normal(k_obs, (batch, obs_dim), jnp.float32)
    params = init_params(k_par, obs_dim, hidden_dim)
    prepared = prepare_params(params)          # one-time layout + bf16 cast

    values = jax.block_until_ready(mlp_critic_forward(obs, prepared))
    ref = _reference_forward(obs, params)
    assert values.shape == (batch,), values.shape
    assert jnp.allclose(values, ref, atol=1e-2, rtol=1e-2), (values, ref)

    # Ragged batch: B not a multiple of the batch tile (padded tail rows are
    # computed on don't-care data but masked on writeback; rows are independent).
    batch2 = 200
    obs2 = jax.random.normal(k_obs2, (batch2, obs_dim), jnp.float32)
    values2 = jax.block_until_ready(mlp_critic_forward(obs2, prepared))
    ref2 = _reference_forward(obs2, params)
    assert values2.shape == (batch2,), values2.shape
    assert jnp.allclose(values2, ref2, atol=1e-2, rtol=1e-2), (values2, ref2)

    print("KERNEL_OK")
</pallas_src>

<mosaic_0001>
module attributes {stable_mosaic.version = 11 : i64} {
  func.func @_mlp_critic_kernel(%arg0: i32, %arg1: memref<192x16xf32, #tpu.memory_space<vmem>>, %arg2: memref<16x128xbf16, #tpu.memory_space<vmem>>, %arg3: memref<1x128xf32, #tpu.memory_space<vmem>>, %arg4: memref<128x128xbf16, #tpu.memory_space<vmem>>, %arg5: memref<1x128xf32, #tpu.memory_space<vmem>>, %arg6: memref<1x128xf32, #tpu.memory_space<vmem>>, %arg7: memref<1x1xf32, #tpu.memory_space<smem>>, %arg8: memref<192x1xf32, #tpu.memory_space<vmem>>) attributes {dimension_semantics = [#tpu.dimension_semantics<parallel>], iteration_bounds = array<i64: 1>, scalar_prefetch = 0 : i64, scratch_operands = 0 : i64, tpu.core_type = #tpu.core_type<tc>, window_params = [{transform_indices = @transform_0, window_bounds = array<i64: 192, 16>}, {pipeline_mode = #tpu.pipeline_mode<synchronous>, transform_indices = @transform_1, window_bounds = array<i64: 16, 128>}, {pipeline_mode = #tpu.pipeline_mode<synchronous>, transform_indices = @transform_2, window_bounds = array<i64: 1, 128>}, {pipeline_mode = #tpu.pipeline_mode<synchronous>, transform_indices = @transform_3, window_bounds = array<i64: 128, 128>}, {pipeline_mode = #tpu.pipeline_mode<synchronous>, transform_indices = @transform_4, window_bounds = array<i64: 1, 128>}, {pipeline_mode = #tpu.pipeline_mode<synchronous>, transform_indices = @transform_5, window_bounds = array<i64: 1, 128>}, {transform_indices = @transform_6, window_bounds = array<i64: 1, 1>}, {transform_indices = @transform_7, window_bounds = array<i64: 192, 1>}]} {
    %c0 = arith.constant 0 : index
    %c0_0 = arith.constant 0 : index
    %0 = vector.load %arg1[%c0, %c0_0] : memref<192x16xf32, #tpu.memory_space<vmem>>, vector<192x16xf32>
    %1 = arith.truncf %0 : vector<192x16xf32> to vector<192x16xbf16>
    %c0_1 = arith.constant 0 : index
    %c0_2 = arith.constant 0 : index
    %2 = vector.load %arg2[%c0_1, %c0_2] : memref<16x128xbf16, #tpu.memory_space<vmem>>, vector<16x128xbf16>
    %cst = arith.constant dense<0.000000e+00> : vector<192x128xf32>
    %3 = tpu.matmul %1, %2, %cst {dimension_numbers = #tpu.dot_dimension_numbers<[1], [0], [0], [1], [0, 0, 1, 1], [], []>} : vector<192x16xbf16>, vector<16x128xbf16>, vector<192x128xf32> -> vector<192x128xf32>
    %c0_3 = arith.constant 0 : index
    %c0_4 = arith.constant 0 : index
    %4 = vector.load %arg3[%c0_3, %c0_4] : memref<1x128xf32, #tpu.memory_space<vmem>>, vector<1x128xf32>
    %5 = vector.broadcast %4 : vector<1x128xf32> to vector<192x128xf32>
    %6 = arith.addf %3, %5 : vector<192x128xf32>
    %cst_5 = arith.constant 0.000000e+00 : f32
    %7 = vector.broadcast %cst_5 : f32 to vector<192x128xf32>
    %8 = arith.maximumf %6, %7 : vector<192x128xf32>
    %9 = arith.truncf %8 : vector<192x128xf32> to vector<192x128xbf16>
    %cst_6 = arith.constant 0.000000e+00 : f32
    %10 = vector.broadcast %cst_6 : f32 to vector<192x1xf32>
    %c0_7 = arith.constant 0 : index
    %c0_8 = arith.constant 0 : index
    %11 = vector.load %arg4[%c0_7, %c0_8] : memref<128x128xbf16, #tpu.memory_space<vmem>>, vector<128x128xbf16>
    %cst_9 = arith.constant dense<0.000000e+00> : vector<192x128xf32>
    %12 = tpu.matmul %9, %11, %cst_9 {dimension_numbers = #tpu.dot_dimension_numbers<[1], [0], [0], [1], [0, 0, 1, 1], [], []>} : vector<192x128xbf16>, vector<128x128xbf16>, vector<192x128xf32> -> vector<192x128xf32>
    %c0_10 = arith.constant 0 : index
    %c0_11 = arith.constant 0 : index
    %13 = vector.load %arg5[%c0_10, %c0_11] : memref<1x128xf32, #tpu.memory_space<vmem>>, vector<1x128xf32>
    %14 = vector.broadcast %13 : vector<1x128xf32> to vector<192x128xf32>
    %15 = arith.addf %12, %14 : vector<192x128xf32>
    %cst_12 = arith.constant 0.000000e+00 : f32
    %16 = vector.broadcast %cst_12 : f32 to vector<192x128xf32>
    %17 = arith.maximumf %15, %16 : vector<192x128xf32>
    %c0_13 = arith.constant 0 : index
    %c0_14 = arith.constant 0 : index
    %18 = vector.load %arg6[%c0_13, %c0_14] : memref<1x128xf32, #tpu.memory_space<vmem>>, vector<1x128xf32>
    %19 = vector.broadcast %18 : vector<1x128xf32> to vector<192x128xf32>
    %20 = arith.mulf %17, %19 : vector<192x128xf32>
    %cst_15 = arith.constant dense<0.000000e+00> : vector<192xf32>
    %21 = vector.multi_reduction <add>, %20, %cst_15 [1] : vector<192x128xf32> to vector<192xf32>
    %22 = vector.shape_cast %21 : vector<192xf32> to vector<192x1xf32>
    %23 = arith.addf %10, %22 : vector<192x1xf32>
    %c0_16 = arith.constant 0 : index
    %c0_17 = arith.constant 0 : index
    %24 = memref.load %arg7[%c0_16, %c0_17] : memref<1x1xf32, #tpu.memory_space<smem>>
    %25 = vector.broadcast %24 : f32 to vector<192x1xf32>
    %26 = arith.addf %23, %25 : vector<192x1xf32>
    %c0_18 = arith.constant 0 : index
    %c0_19 = arith.constant 0 : index
    %27 = vector.load %arg8[%c0_18, %c0_19] : memref<192x1xf32, #tpu.memory_space<vmem>>, vector<192x1xf32>
    tpu.vector_store %arg8[%c0_18, %c0_19], %26 {strides = array<i32>} : memref<192x1xf32, #tpu.memory_space<vmem>>, vector<192x1xf32>,
    return
  }
  func.func @transform_0(%arg0: i32) -> (i32, i32) {
    %c0_i32 = arith.constant 0 : i32
    %c0_i32_0 = arith.constant 0 : i32
    return %arg0, %c0_i32 : i32, i32
  }
  func.func @transform_1(%arg0: i32) -> (i32, i32) {
    %c0_i32 = arith.constant 0 : i32
    %c0_i32_0 = arith.constant 0 : i32
    %c0_i32_1 = arith.constant 0 : i32
    return %c0_i32, %c0_i32_0 : i32, i32
  }
  func.func @transform_2(%arg0: i32) -> (i32, i32) {
    %c0_i32 = arith.constant 0 : i32
    %c0_i32_0 = arith.constant 0 : i32
    %c0_i32_1 = arith.constant 0 : i32
    return %c0_i32, %c0_i32_0 : i32, i32
  }
  func.func @transform_3(%arg0: i32) -> (i32, i32) {
    %c0_i32 = arith.constant 0 : i32
    %c0_i32_0 = arith.constant 0 : i32
    %c0_i32_1 = arith.constant 0 : i32
    return %c0_i32, %c0_i32_0 : i32, i32
  }
  func.func @transform_4(%arg0: i32) -> (i32, i32) {
    %c0_i32 = arith.constant 0 : i32
    %c0_i32_0 = arith.constant 0 : i32
    %c0_i32_1 = arith.constant 0 : i32
    return %c0_i32, %c0_i32_0 : i32, i32
  }
  func.func @transform_5(%arg0: i32) -> (i32, i32) {
    %c0_i32 = arith.constant 0 : i32
    %c0_i32_0 = arith.constant 0 : i32
    %c0_i32_1 = arith.constant 0 : i32
    return %c0_i32, %c0_i32_0 : i32, i32
  }
  func.func @transform_6(%arg0: i32) -> (i32, i32) {
    %c0_i32 = arith.constant 0 : i32
    %c0_i32_0 = arith.constant 0 : i32
    %c0_i32_1 = arith.constant 0 : i32
    return %c0_i32, %c0_i32_0 : i32, i32
  }
  func.func @transform_7(%arg0: i32) -> (i32, i32) {
    %c0_i32 = arith.constant 0 : i32
    %c0_i32_0 = arith.constant 0 : i32
    return %arg0, %c0_i32 : i32, i32
  }
}

</mosaic_0001>

<llo_original>
// kernel: mlp_critic_forward.1
$region0: #{mlp_critic_forward.1}
  #allocation0 [shape = 'u32[]', space=smem, size = 0x4, offset = 0x4, fixed_abs, tag = 'smem constant byte address 0x4 - core index']
  #allocation1 [shape = 'u32[144,128]{1,0:T(1,128)}', space=vmem, size = 0x12000, scoped, tag = 'internal scratch']
  #allocation2 [shape = 'f32[1,1]{1,0:T(1,128)S(6)}', space=smem, size = 0x200, scoped, tag = 'scoped memory for mlp_critic_forward.1']
  %s0 = inlined_call_operand.vmem [shape: f32[192,16], index: 0, kind: input, shape index: {}]
  %s1 = inlined_call_operand.vmem [shape: bf16[16,128], index: 1, kind: input, shape index: {}]
  %s2 = inlined_call_operand.vmem [shape: f32[1,128], index: 2, kind: input, shape index: {}]
  %s3 = inlined_call_operand.vmem [shape: bf16[128,128], index: 3, kind: input, shape index: {}]
  %s4 = inlined_call_operand.vmem [shape: f32[1,128], index: 4, kind: input, shape index: {}]
  %s5 = inlined_call_operand.vmem [shape: f32[1,128], index: 5, kind: input, shape index: {}]
  %s6 = inlined_call_operand.<no memory space> [shape: f32[1,1], index: 6, kind: input, shape index: {}]
  %s7 = inlined_call_operand.vmem [shape: f32[192,1], index: 7, kind: output, shape index: {}]
  %s8 = sld [smem:[#allocation0]]
  $region38: #{mlp_critic_forward.1} parent=0
    _
  %s10 = ssub.s32 1, %s8
  %s11 = scalar_select 0, %s10, %s8
  %12 = sst [smem:[#allocation2]] %s6
  // Predicated region
  $region2: #{mlp_critic_forward.1} parent=0 // pred_check
    _
  $region3: #{mlp_critic_forward.1} parent=0 // pred_check_branch
    %14 = sbr.rel (0) target = $region5
  $region4: #{mlp_critic_forward.1} parent=0 // pred_region
    _
  $region5: #{mlp_critic_forward.1} parent=0 // pred_fallthru
    _
  // Predicated region
  $region6: #{mlp_critic_forward.1} parent=0 // pred_check
    _
  $region7: #{mlp_critic_forward.1} parent=0 // pred_check_branch
    %16 = sbr.rel (0) target = $region9
  $region8: #{mlp_critic_forward.1} parent=0 // pred_region
    _
  $region9: #{mlp_critic_forward.1} parent=0 // pred_fallthru
    _
  // Predicated region
  $region10: #{mlp_critic_forward.1} parent=0 // pred_check
    _
  $region11: #{mlp_critic_forward.1} parent=0 // pred_check_branch
    %18 = sbr.rel (0) target = $region13
  $region12: #{mlp_critic_forward.1} parent=0 // pred_region
    _
  $region13: #{mlp_critic_forward.1} parent=0 // pred_fallthru
    _
  // Predicated region
  $region14: #{mlp_critic_forward.1} parent=0 // pred_check
    _
  $region15: #{mlp_critic_forward.1} parent=0 // pred_check_branch
    %20 = sbr.rel (0) target = $region17
  $region16: #{mlp_critic_forward.1} parent=0 // pred_region
    _
  $region17: #{mlp_critic_forward.1} parent=0 // pred_fallthru
    _
  // Predicated region
  $region18: #{mlp_critic_forward.1} parent=0 // pred_check
    _
  $region19: #{mlp_critic_forward.1} parent=0 // pred_check_branch
    %22 = sbr.rel (0) target = $region21
  $region20: #{mlp_critic_forward.1} parent=0 // pred_region
    _
  $region21: #{mlp_critic_forward.1} parent=0 // pred_fallthru
    _
  // Predicated region
  $region22: #{mlp_critic_forward.1} parent=0 // pred_check
    _
  $region23: #{mlp_critic_forward.1} parent=0 // pred_check_branch
    %24 = sbr.rel (0) target = $region25
  $region24: #{mlp_critic_forward.1} parent=0 // pred_region
    _
  $region25: #{mlp_critic_forward.1} parent=0 // pred_fallthru
    _
  // Predicated region
  $region26: #{mlp_critic_forward.1} parent=0 // pred_check
    _
  $region27: #{mlp_critic_forward.1} parent=0 // pred_check_branch
    %26 = sbr.rel (0) target = $region29
  $region28: #{mlp_critic_forward.1} parent=0 // pred_region
    _
  $region29: #{mlp_critic_forward.1} parent=0 // pred_fallthru
    _
  %v28 = vld [vmem:[%s0] sm:$0xff]
  %v29 = vld [vmem:[%s0 + $0x8] sm:$0xff]
  %v30 = vld [vmem:[%s0 + $0x10] sm:$0xff]
  %v31 = vld [vmem:[%s0 + $0x18] sm:$0xff]
  %v32 = vld [vmem:[%s0 + $0x20] sm:$0xff]
  %v33 = vld [vmem:[%s0 + $0x28] sm:$0xff]
  %v34 = vld [vmem:[%s0 + $0x30] sm:$0xff]
  %v35 = vld [vmem:[%s0 + $0x38] sm:$0xff]
  %v36 = vld [vmem:[%s0 + $0x40] sm:$0xff]
  %v37 = vld [vmem:[%s0 + $0x48] sm:$0xff]
  %v38 = vld [vmem:[%s0 + $0x50] sm:$0xff]
  %v39 = vld [vmem:[%s0 + $0x58] sm:$0xff]
  %v40 = vld [vmem:[%s0 + $0x60] sm:$0xff]
  %v41 = vld [vmem:[%s0 + $0x68] sm:$0xff]
  %v42 = vld [vmem:[%s0 + $0x70] sm:$0xff]
  %v43 = vld [vmem:[%s0 + $0x78] sm:$0xff]
  %v44 = vld [vmem:[%s0 + $0x80] sm:$0xff]
  %v45 = vld [vmem:[%s0 + $0x88] sm:$0xff]
  %v46 = vld [vmem:[%s0 + $0x90] sm:$0xff]
  %v47 = vld [vmem:[%s0 + $0x98] sm:$0xff]
  %v48 = vld [vmem:[%s0 + $0xa0] sm:$0xff]
  %v49 = vld [vmem:[%s0 + $0xa8] sm:$0xff]
  %v50 = vld [vmem:[%s0 + $0xb0] sm:$0xff]
  %v51 = vld [vmem:[%s0 + $0xb8] sm:$0xff]
  %v52 = vpack.c.bf16 %v29, %v28
  %v53 = vpack.c.bf16 %v31, %v30
  %v54 = vpack.c.bf16 %v33, %v32
  %v55 = vpack.c.bf16 %v35, %v34
  %v56 = vpack.c.bf16 %v37, %v36
  %v57 = vpack.c.bf16 %v39, %v38
  %v58 = vpack.c.bf16 %v41, %v40
  %v59 = vpack.c.bf16 %v43, %v42
  %v60 = vpack.c.bf16 %v45, %v44
  %v61 = vpack.c.bf16 %v47, %v46
  %v62 = vpack.c.bf16 %v49, %v48
  %v63 = vpack.c.bf16 %v51, %v50
  %v64 = vld [vmem:[%s1] sm:$0xf]
  %v65 = vld [vmem:[%s1 + $0x4] sm:$0xf]
  %v66 = vld [vmem:[%s2] sm:$0x1]
  %v68 = vlaneseq
  %v69 = vshrl.u32 %v68, 7
  %v70 = vsub.s32 0, %v69
  %v71 = vrot.slane %v66, %v70
  %v75 = vunpack.c.l.b16 %v64
  %v76 = vunpack.c.l.b16 %v65
  %v77 = vpack.c.b16 %v76, %v75
  %vm79 = vcmask 130048
  %v81 = vsel %vm79, %v52, 0
  %v84 = vsel %vm79, %v53, 0
  %v87 = vsel %vm79, %v54, 0
  %v90 = vsel %vm79, %v55, 0
  %v93 = vsel %vm79, %v56, 0
  %v96 = vsel %vm79, %v57, 0
  %v99 = vsel %vm79, %v58, 0
  %v102 = vsel %vm79, %v59, 0
  %v105 = vsel %vm79, %v60, 0
  %v108 = vsel %vm79, %v61, 0
  %v111 = vsel %vm79, %v62, 0
  %v114 = vsel %vm79, %v63, 0
  %116 = vmatprep.subr.bf16.mxu0 0
  %117 = vmatpush1.bf16.msra.mxu0 0
  %118 = vmatprep.subr.bf16.mxu0 0
  %119 = vmatpush1.bf16.msra.mxu0 0
  %120 = vmatprep.subr.bf16.mxu0 0
  %121 = vmatpush1.bf16.msra.mxu0 0
  %122 = vmatprep.subr.bf16.mxu0 0
  %123 = vmatpush1.bf16.msra.mxu0 0
  %124 = vmatprep.subr.bf16.mxu0 0
  %125 = vmatpush1.bf16.msra.mxu0 0
  %126 = vmatprep.subr.bf16.mxu0 0
  %127 = vmatpush1.bf16.msra.mxu0 0
  %128 = vmatprep.subr.bf16.mxu0 0
  %129 = vmatpush1.bf16.msra.mxu0 0
  %130 = vmatprep.subr.bf16.mxu0 0
  %131 = vmatpush1.bf16.msra.mxu0 %v77
  %132 = vmatprep.subr.bf16.mxu0 0
  %133 = vmatpush2.bf16.msra.mxu0 0
  %134 = vmatprep.subr.bf16.mxu0 0
  %135 = vmatpush2.bf16.msra.mxu0 0
  %136 = vmatprep.subr.bf16.mxu0 0
  %137 = vmatpush2.bf16.msra.mxu0 0
  %138 = vmatprep.subr.bf16.mxu0 0
  %139 = vmatpush2.bf16.msra.mxu0 0
  %140 = vmatprep.subr.bf16.mxu0 0
  %141 = vmatpush2.bf16.msra.mxu0 0
  %142 = vmatprep.subr.bf16.mxu0 0
  %143 = vmatpush2.bf16.msra.mxu0 0
  %144 = vmatprep.subr.bf16.mxu0 0
  %145 = vmatpush2.bf16.msra.mxu0 0
  %146 = vmatprep.subr.bf16.mxu0 0
  %147 = vmatpush2.bf16.msra.mxu0 0
  %148 = vmatprep.mubr.bf16.mxu0 0
  %149 = vmatmul.mubr.bf16.gmra.mxu0 %v81
  %v150 = vpop.f32.mrf.mxu0
  %v151 = vadd.f32 %v71, %v150
  %v152 = vpop.f32.mrf.mxu0
  %v153 = vpop.f32.mrf.mxu0
  %v154 = vadd.f32 %v71, %v153
  %v155 = vpop.f32.mrf.mxu0
  %156 = vmatprep.mubr.bf16.mxu0 0
  %157 = vmatmul.mubr.bf16.gmra.mxu0 %v84
  %v158 = vpop.f32.mrf.mxu0
  %v159 = vadd.f32 %v71, %v158
  %v160 = vpop.f32.mrf.mxu0
  %v161 = vpop.f32.mrf.mxu0
  %v162 = vadd.f32 %v71, %v161
  %v163 = vpop.f32.mrf.mxu0
  %164 = vmatprep.mubr.bf16.mxu0 0
  %165 = vmatmul.mubr.bf16.gmra.mxu0 %v87
  %v166 = vpop.f32.mrf.mxu0
  %v167 = vadd.f32 %v71, %v166
  %v168 = vpop.f32.mrf.mxu0
  %v169 = vpop.f32.mrf.mxu0
  %v170 = vadd.f32 %v71, %v169
  %v171 = vpop.f32.mrf.mxu0
  %172 = vmatprep.mubr.bf16.mxu0 0
  %173 = vmatmul.mubr.bf16.gmra.mxu0 %v90
  %v174 = vpop.f32.mrf.mxu0
  %v175 = vadd.f32 %v71, %v174
  %v176 = vpop.f32.mrf.mxu0
  %v177 = vpop.f32.mrf.mxu0
  %v178 = vadd.f32 %v71, %v177
  %v179 = vpop.f32.mrf.mxu0
  %180 = vmatprep.mubr.bf16.mxu0 0
  %181 = vmatmul.mubr.bf16.gmra.mxu0 %v93
  %v182 = vpop.f32.mrf.mxu0
  %v183 = vadd.f32 %v71, %v182
  %v184 = vpop.f32.mrf.mxu0
  %v185 = vpop.f32.mrf.mxu0
  %v186 = vadd.f32 %v71, %v185
  %v187 = vpop.f32.mrf.mxu0
  %188 = vmatprep.mubr.bf16.mxu0 0
  %189 = vmatmul.mubr.bf16.gmra.mxu0 %v96
  %v190 = vpop.f32.mrf.mxu0
  %v191 = vadd.f32 %v71, %v190
  %v192 = vpop.f32.mrf.mxu0
  %v193 = vpop.f32.mrf.mxu0
  %v194 = vadd.f32 %v71, %v193
  %v195 = vpop.f32.mrf.mxu0
  %196 = vmatprep.mubr.bf16.mxu0 0
  %197 = vmatmul.mubr.bf16.gmra.mxu0 %v99
  %v198 = vpop.f32.mrf.mxu0
  %v199 = vadd.f32 %v71, %v198
  %v200 = vpop.f32.mrf.mxu0
  %v201 = vpop.f32.mrf.mxu0
  %v202 = vadd.f32 %v71, %v201
  %v203 = vpop.f32.mrf.mxu0
  %204 = vmatprep.mubr.bf16.mxu0 0
  %205 = vmatmul.mubr.bf16.gmra.mxu0 %v102
  %v206 = vpop.f32.mrf.mxu0
  %v207 = vadd.f32 %v71, %v206
  %v208 = vpop.f32.mrf.mxu0
  %v209 = vpop.f32.mrf.mxu0
  %v210 = vadd.f32 %v71, %v209
  %v211 = vpop.f32.mrf.mxu0
  %212 = vmatprep.mubr.bf16.mxu0 0
  %213 = vmatmul.mubr.bf16.gmra.mxu0 %v105
  %v214 = vpop.f32.mrf.mxu0
  %v215 = vadd.f32 %v71, %v214
  %v216 = vpop.f32.mrf.mxu0
  %v217 = vpop.f32.mrf.mxu0
  %v218 = vadd.f32 %v71, %v217
  %v219 = vpop.f32.mrf.mxu0
  %220 = vmatprep.mubr.bf16.mxu0 0
  %221 = vmatmul.mubr.bf16.gmra.mxu0 %v108
  %v222 = vpop.f32.mrf.mxu0
  %v223 = vadd.f32 %v71, %v222
  %v224 = vpop.f32.mrf.mxu0
  %v225 = vpop.f32.mrf.mxu0
  %v226 = vadd.f32 %v71, %v225
  %v227 = vpop.f32.mrf.mxu0
  %228 = vmatprep.mubr.bf16.mxu0 0
  %229 = vmatmul.mubr.bf16.gmra.mxu0 %v111
  %v230 = vpop.f32.mrf.mxu0
  %v231 = vadd.f32 %v71, %v230
  %v232 = vpop.f32.mrf.mxu0
  %v233 = vpop.f32.mrf.mxu0
  %v234 = vadd.f32 %v71, %v233
  %v235 = vpop.f32.mrf.mxu0
  %236 = vmatprep.mubr.bf16.mxu0 0
  %237 = vmatmul.mubr.bf16.gmra.mxu0 %v114
  %v238 = vpop.f32.mrf.mxu0
  %v239 = vadd.f32 %v71, %v238
  %v240 = vpop.f32.mrf.mxu0
  %v241 = vpop.f32.mrf.mxu0
  %v242 = vadd.f32 %v71, %v241
  %v243 = vpop.f32.mrf.mxu0
  %244 = vdwg.mxu0
  %v245 = vmax.f32 %v151, 0.0
  %v246 = vmax.f32 %v154, 0.0
  %v247 = vmax.f32 %v159, 0.0
  %v248 = vmax.f32 %v162, 0.0
  %v249 = vmax.f32 %v167, 0.0
  %v250 = vmax.f32 %v170, 0.0
  %v251 = vmax.f32 %v175, 0.0
  %v252 = vmax.f32 %v178, 0.0
  %v253 = vmax.f32 %v183, 0.0
  %v254 = vmax.f32 %v186, 0.0
  %v255 = vmax.f32 %v191, 0.0
  %v256 = vmax.f32 %v194, 0.0
  %v257 = vmax.f32 %v199, 0.0
  %v258 = vmax.f32 %v202, 0.0
  %v259 = vmax.f32 %v207, 0.0
  %v260 = vmax.f32 %v210, 0.0
  %v261 = vmax.f32 %v215, 0.0
  %v262 = vmax.f32 %v218, 0.0
  %v263 = vmax.f32 %v223, 0.0
  %v264 = vmax.f32 %v226, 0.0
  %v265 = vmax.f32 %v231, 0.0
  %v266 = vmax.f32 %v234, 0.0
  %v267 = vmax.f32 %v239, 0.0
  %v268 = vmax.f32 %v242, 0.0
  %v269 = vpack.c.bf16 %v246, %v245
  %v270 = vpack.c.bf16 %v248, %v247
  %v271 = vpack.c.bf16 %v250, %v249
  %v272 = vpack.c.bf16 %v252, %v251
  %v273 = vpack.c.bf16 %v254, %v253
  %v274 = vpack.c.bf16 %v256, %v255
  %v275 = vpack.c.bf16 %v258, %v257
  %v276 = vpack.c.bf16 %v260, %v259
  %v277 = vpack.c.bf16 %v262, %v261
  %v278 = vpack.c.bf16 %v264, %v263
  %v279 = vpack.c.bf16 %v266, %v265
  %v280 = vpack.c.bf16 %v268, %v267
  %v281 = vld [vmem:[%s3] sm:$0xf]
  %v282 = vld [vmem:[%s3 + $0x4] sm:$0xf]
  %v283 = vld [vmem:[%s3 + $0x8] sm:$0xf]
  %v284 = vld [vmem:[%s3 + $0xc] sm:$0xf]
  %v285 = vld [vmem:[%s3 + $0x10] sm:$0xf]
  %v286 = vld [vmem:[%s3 + $0x14] sm:$0xf]
  %v287 = vld [vmem:[%s3 + $0x18] sm:$0xf]
  %v288 = vld [vmem:[%s3 + $0x1c] sm:$0xf]
  %v289 = vld [vmem:[%s3 + $0x20] sm:$0xf]
  %v290 = vld [vmem:[%s3 + $0x24] sm:$0xf]
  %v291 = vld [vmem:[%s3 + $0x28] sm:$0xf]
  %v292 = vld [vmem:[%s3 + $0x2c] sm:$0xf]
  %v293 = vld [vmem:[%s3 + $0x30] sm:$0xf]
  %v294 = vld [vmem:[%s3 + $0x34] sm:$0xf]
  %v295 = vld [vmem:[%s3 + $0x38] sm:$0xf]
  %v296 = vld [vmem:[%s3 + $0x3c] sm:$0xf]
  %v297 = vld [vmem:[%s4] sm:$0x1]
  %v299 = vlaneseq
  %v300 = vshrl.u32 %v299, 7
  %v301 = vsub.s32 0, %v300
  %v302 = vrot.slane %v297, %v301
  %v320 = vunpack.c.l.b16 %v281
  %v321 = vunpack.c.l.b16 %v282
  %v322 = vunpack.c.l.b16 %v283
  %v323 = vunpack.c.l.b16 %v284
  %v324 = vunpack.c.l.b16 %v285
  %v325 = vunpack.c.l.b16 %v286
  %v326 = vunpack.c.l.b16 %v287
  %v327 = vunpack.c.l.b16 %v288
  %v328 = vunpack.c.l.b16 %v289
  %v329 = vunpack.c.l.b16 %v290
  %v330 = vunpack.c.l.b16 %v291
  %v331 = vunpack.c.l.b16 %v292
  %v332 = vunpack.c.l.b16 %v293
  %v333 = vunpack.c.l.b16 %v294
  %v334 = vunpack.c.l.b16 %v295
  %v335 = vunpack.c.l.b16 %v296
  %v336 = vpack.c.b16 %v321, %v320
  %v337 = vpack.c.b16 %v323, %v322
  %v338 = vpack.c.b16 %v325, %v324
  %v339 = vpack.c.b16 %v327, %v326
  %v340 = vpack.c.b16 %v329, %v328
  %v341 = vpack.c.b16 %v331, %v330
  %v342 = vpack.c.b16 %v333, %v332
  %v343 = vpack.c.b16 %v335, %v334
  %352 = vmatprep.subr.bf16.mxu0 0
  %353 = vmatpush1.bf16.msra.mxu0 %v343
  %354 = vmatprep.subr.bf16.mxu0 0
  %355 = vmatpush1.bf16.msra.mxu0 %v342
  %356 = vmatprep.subr.bf16.mxu0 0
  %357 = vmatpush1.bf16.msra.mxu0 %v341
  %358 = vmatprep.subr.bf16.mxu0 0
  %359 = vmatpush1.bf16.msra.mxu0 %v340
  %360 = vmatprep.subr.bf16.mxu0 0
  %361 = vmatpush1.bf16.msra.mxu0 %v339
  %362 = vmatprep.subr.bf16.mxu0 0
  %363 = vmatpush1.bf16.msra.mxu0 %v338
  %364 = vmatprep.subr.bf16.mxu0 0
  %365 = vmatpush1.bf16.msra.mxu0 %v337
  %366 = vmatprep.subr.bf16.mxu0 0
  %367 = vmatpush1.bf16.msra.mxu0 %v336
  %368 = vmatprep.subr.bf16.mxu0 0
  %369 = vmatpush2.bf16.msra.mxu0 0
  %370 = vmatprep.subr.bf16.mxu0 0
  %371 = vmatpush2.bf16.msra.mxu0 0
  %372 = vmatprep.subr.bf16.mxu0 0
  %373 = vmatpush2.bf16.msra.mxu0 0
  %374 = vmatprep.subr.bf16.mxu0 0
  %375 = vmatpush2.bf16.msra.mxu0 0
  %376 = vmatprep.subr.bf16.mxu0 0
  %377 = vmatpush2.bf16.msra.mxu0 0
  %378 = vmatprep.subr.bf16.mxu0 0
  %379 = vmatpush2.bf16.msra.mxu0 0
  %380 = vmatprep.subr.bf16.mxu0 0
  %381 = vmatpush2.bf16.msra.mxu0 0
  %382 = vmatprep.subr.bf16.mxu0 0
  %383 = vmatpush2.bf16.msra.mxu0 0
  %384 = vmatprep.mubr.bf16.mxu0 0
  %385 = vmatmul.mubr.bf16.gmra.mxu0 %v269
  %v386 = vpop.f32.mrf.mxu0
  %v387 = vadd.f32 %v302, %v386
  %v388 = vpop.f32.mrf.mxu0
  %v389 = vpop.f32.mrf.mxu0
  %v390 = vadd.f32 %v302, %v389
  %v391 = vpop.f32.mrf.mxu0
  %392 = vmatprep.mubr.bf16.mxu0 0
  %393 = vmatmul.mubr.bf16.gmra.mxu0 %v270
  %v394 = vpop.f32.mrf.mxu0
  %v395 = vadd.f32 %v302, %v394
  %v396 = vpop.f32.mrf.mxu0
  %v397 = vpop.f32.mrf.mxu0
  %v398 = vadd.f32 %v302, %v397
  %v399 = vpop.f32.mrf.mxu0
  %400 = vmatprep.mubr.bf16.mxu0 0
  %401 = vmatmul.mubr.bf16.gmra.mxu0 %v271
  %v402 = vpop.f32.mrf.mxu0
  %v403 = vadd.f32 %v302, %v402
  %v404 = vpop.f32.mrf.mxu0
  %v405 = vpop.f32.mrf.mxu0
  %v406 = vadd.f32 %v302, %v405
  %v407 = vpop.f32.mrf.mxu0
  %408 = vmatprep.mubr.bf16.mxu0 0
  %409 = vmatmul.mubr.bf16.gmra.mxu0 %v272
  %v410 = vpop.f32.mrf.mxu0
  %v411 = vadd.f32 %v302, %v410
  %v412 = vpop.f32.mrf.mxu0
  %v413 = vpop.f32.mrf.mxu0
  %v414 = vadd.f32 %v302, %v413
  %v415 = vpop.f32.mrf.mxu0
  %416 = vmatprep.mubr.bf16.mxu0 0
  %417 = vmatmul.mubr.bf16.gmra.mxu0 %v273
  %v418 = vpop.f32.mrf.mxu0
  %v419 = vadd.f32 %v302, %v418
  %v420 = vpop.f32.mrf.mxu0
  %v421 = vpop.f32.mrf.mxu0
  %v422 = vadd.f32 %v302, %v421
  %v423 = vpop.f32.mrf.mxu0
  %424 = vmatprep.mubr.bf16.mxu0 0
  %425 = vmatmul.mubr.bf16.gmra.mxu0 %v274
  %v426 = vpop.f32.mrf.mxu0
  %v427 = vadd.f32 %v302, %v426
  %v428 = vpop.f32.mrf.mxu0
  %v429 = vpop.f32.mrf.mxu0
  %v430 = vadd.f32 %v302, %v429
  %v431 = vpop.f32.mrf.mxu0
  %432 = vmatprep.mubr.bf16.mxu0 0
  %433 = vmatmul.mubr.bf16.gmra.mxu0 %v275
  %v434 = vpop.f32.mrf.mxu0
  %v435 = vadd.f32 %v302, %v434
  %v436 = vpop.f32.mrf.mxu0
  %v437 = vpop.f32.mrf.mxu0
  %v438 = vadd.f32 %v302, %v437
  %v439 = vpop.f32.mrf.mxu0
  %440 = vmatprep.mubr.bf16.mxu0 0
  %441 = vmatmul.mubr.bf16.gmra.mxu0 %v276
  %v442 = vpop.f32.mrf.mxu0
  %v443 = vadd.f32 %v302, %v442
  %v444 = vpop.f32.mrf.mxu0
  %v445 = vpop.f32.mrf.mxu0
  %v446 = vadd.f32 %v302, %v445
  %v447 = vpop.f32.mrf.mxu0
  %448 = vmatprep.mubr.bf16.mxu0 0
  %449 = vmatmul.mubr.bf16.gmra.mxu0 %v277
  %v450 = vpop.f32.mrf.mxu0
  %v451 = vadd.f32 %v302, %v450
  %v452 = vpop.f32.mrf.mxu0
  %v453 = vpop.f32.mrf.mxu0
  %v454 = vadd.f32 %v302, %v453
  %v455 = vpop.f32.mrf.mxu0
  %456 = vmatprep.mubr.bf16.mxu0 0
  %457 = vmatmul.mubr.bf16.gmra.mxu0 %v278
  %v458 = vpop.f32.mrf.mxu0
  %v459 = vadd.f32 %v302, %v458
  %v460 = vpop.f32.mrf.mxu0
  %v461 = vpop.f32.mrf.mxu0
  %v462 = vadd.f32 %v302, %v461
  %v463 = vpop.f32.mrf.mxu0
  %464 = vmatprep.mubr.bf16.mxu0 0
  %465 = vmatmul.mubr.bf16.gmra.mxu0 %v279
  %v466 = vpop.f32.mrf.mxu0
  %v467 = vadd.f32 %v302, %v466
  %v468 = vpop.f32.mrf.mxu0
  %v469 = vpop.f32.mrf.mxu0
  %v470 = vadd.f32 %v302, %v469
  %v471 = vpop.f32.mrf.mxu0
  %472 = vmatprep.mubr.bf16.mxu0 0
  %473 = vmatmul.mubr.bf16.gmra.mxu0 %v280
  %v474 = vpop.f32.mrf.mxu0
  %v475 = vadd.f32 %v302, %v474
  %v476 = vpop.f32.mrf.mxu0
  %v477 = vpop.f32.mrf.mxu0
  %v478 = vadd.f32 %v302, %v477
  %v479 = vpop.f32.mrf.mxu0
  %480 = vdwg.mxu0
  %v481 = vmax.f32 %v387, 0.0
  %v482 = vmax.f32 %v390, 0.0
  %v483 = vmax.f32 %v395, 0.0
  %v484 = vmax.f32 %v398, 0.0
  %v485 = vmax.f32 %v403, 0.0
  %v486 = vmax.f32 %v406, 0.0
  %v487 = vmax.f32 %v411, 0.0
  %v488 = vmax.f32 %v414, 0.0
  %v489 = vmax.f32 %v419, 0.0
  %v490 = vmax.f32 %v422, 0.0
  %v491 = vmax.f32 %v427, 0.0
  %v492 = vmax.f32 %v430, 0.0
  %v493 = vmax.f32 %v435, 0.0
  %v494 = vmax.f32 %v438, 0.0
  %v495 = vmax.f32 %v443, 0.0
  %v496 = vmax.f32 %v446, 0.0
  %v497 = vmax.f32 %v451, 0.0
  %v498 = vmax.f32 %v454, 0.0
  %v499 = vmax.f32 %v459, 0.0
  %v500 = vmax.f32 %v462, 0.0
  %v501 = vmax.f32 %v467, 0.0
  %v502 = vmax.f32 %v470, 0.0
  %v503 = vmax.f32 %v475, 0.0
  %v504 = vmax.f32 %v478, 0.0
  %v505 = vld [vmem:[%s5] sm:$0x1]
  %v507 = vlaneseq
  %v508 = vshrl.u32 %v507, 7
  %v509 = vsub.s32 0, %v508
  %v510 = vrot.slane %v505, %v509
  %v512 = vmul.f32 %v481, %v510
  %v513 = vmul.f32 %v482, %v510
  %v514 = vmul.f32 %v483, %v510
  %v515 = vmul.f32 %v484, %v510
  %v516 = vmul.f32 %v485, %v510
  %v517 = vmul.f32 %v486, %v510
  %v518 = vmul.f32 %v487, %v510
  %v519 = vmul.f32 %v488, %v510
  %v520 = vmul.f32 %v489, %v510
  %v521 = vmul.f32 %v490, %v510
  %v522 = vmul.f32 %v491, %v510
  %v523 = vmul.f32 %v492, %v510
  %v524 = vmul.f32 %v493, %v510
  %v525 = vmul.f32 %v494, %v510
  %v526 = vmul.f32 %v495, %v510
  %v527 = vmul.f32 %v496, %v510
  %v528 = vmul.f32 %v497, %v510
  %v529 = vmul.f32 %v498, %v510
  %v530 = vmul.f32 %v499, %v510
  %v531 = vmul.f32 %v500, %v510
  %v532 = vmul.f32 %v501, %v510
  %v533 = vmul.f32 %v502, %v510
  %v534 = vmul.f32 %v503, %v510
  %v535 = vmul.f32 %v504, %v510
  %536 = vadd.xlane.f32.xlu0 %v512
  %v537 = vpop.xlane.xlu0 %536
  %538 = vadd.xlane.f32.xlu0 %v513
  %v539 = vpop.xlane.xlu0 %538
  %540 = vadd.xlane.f32.xlu0 %v514
  %v541 = vpop.xlane.xlu0 %540
  %542 = vadd.xlane.f32.xlu0 %v515
  %v543 = vpop.xlane.xlu0 %542
  %544 = vadd.xlane.f32.xlu0 %v516
  %v545 = vpop.xlane.xlu0 %544
  %546 = vadd.xlane.f32.xlu0 %v517
  %v547 = vpop.xlane.xlu0 %546
  %548 = vadd.xlane.f32.xlu0 %v518
  %v549 = vpop.xlane.xlu0 %548
  %550 = vadd.xlane.f32.xlu0 %v519
  %v551 = vpop.xlane.xlu0 %550
  %552 = vadd.xlane.f32.xlu0 %v520
  %v553 = vpop.xlane.xlu0 %552
  %554 = vadd.xlane.f32.xlu0 %v521
  %v555 = vpop.xlane.xlu0 %554
  %556 = vadd.xlane.f32.xlu0 %v522
  %v557 = vpop.xlane.xlu0 %556
  %558 = vadd.xlane.f32.xlu0 %v523
  %v559 = vpop.xlane.xlu0 %558
  %560 = vadd.xlane.f32.xlu0 %v524
  %v561 = vpop.xlane.xlu0 %560
  %562 = vadd.xlane.f32.xlu0 %v525
  %v563 = vpop.xlane.xlu0 %562
  %564 = vadd.xlane.f32.xlu0 %v526
  %v565 = vpop.xlane.xlu0 %564
  %566 = vadd.xlane.f32.xlu0 %v527
  %v567 = vpop.xlane.xlu0 %566
  %568 = vadd.xlane.f32.xlu0 %v528
  %v569 = vpop.xlane.xlu0 %568
  %570 = vadd.xlane.f32.xlu0 %v529
  %v571 = vpop.xlane.xlu0 %570
  %572 = vadd.xlane.f32.xlu0 %v530
  %v573 = vpop.xlane.xlu0 %572
  %574 = vadd.xlane.f32.xlu0 %v531
  %v575 = vpop.xlane.xlu0 %574
  %576 = vadd.xlane.f32.xlu0 %v532
  %v577 = vpop.xlane.xlu0 %576
  %578 = vadd.xlane.f32.xlu0 %v533
  %v579 = vpop.xlane.xlu0 %578
  %580 = vadd.xlane.f32.xlu0 %v534
  %v581 = vpop.xlane.xlu0 %580
  %582 = vadd.xlane.f32.xlu0 %v535
  %v583 = vpop.xlane.xlu0 %582
  %v584 = vadd.f32 %v537, 0.0
  %v585 = vadd.f32 %v539, 0.0
  %v586 = vadd.f32 %v541, 0.0
  %v587 = vadd.f32 %v543, 0.0
  %v588 = vadd.f32 %v545, 0.0
  %v589 = vadd.f32 %v547, 0.0
  %v590 = vadd.f32 %v549, 0.0
  %v591 = vadd.f32 %v551, 0.0
  %v592 = vadd.f32 %v553, 0.0
  %v593 = vadd.f32 %v555, 0.0
  %v594 = vadd.f32 %v557, 0.0
  %v595 = vadd.f32 %v559, 0.0
  %v596 = vadd.f32 %v561, 0.0
  %v597 = vadd.f32 %v563, 0.0
  %v598 = vadd.f32 %v565, 0.0
  %v599 = vadd.f32 %v567, 0.0
  %v600 = vadd.f32 %v569, 0.0
  %v601 = vadd.f32 %v571, 0.0
  %v602 = vadd.f32 %v573, 0.0
  %v603 = vadd.f32 %v575, 0.0
  %v604 = vadd.f32 %v577, 0.0
  %v605 = vadd.f32 %v579, 0.0
  %v606 = vadd.f32 %v581, 0.0
  %v607 = vadd.f32 %v583, 0.0
  %s608 = sld [smem:[#allocation2]]
  %v609 = vstv %s608
  %v610 = vadd.f32 %v584, %v609
  %v611 = vadd.f32 %v585, %v609
  %v612 = vadd.f32 %v586, %v609
  %v613 = vadd.f32 %v587, %v609
  %v614 = vadd.f32 %v588, %v609
  %v615 = vadd.f32 %v589, %v609
  %v616 = vadd.f32 %v590, %v609
  %v617 = vadd.f32 %v591, %v609
  %v618 = vadd.f32 %v592, %v609
  %v619 = vadd.f32 %v593, %v609
  %v620 = vadd.f32 %v594, %v609
  %v621 = vadd.f32 %v595, %v609
  %v622 = vadd.f32 %v596, %v609
  %v623 = vadd.f32 %v597, %v609
  %v624 = vadd.f32 %v598, %v609
  %v625 = vadd.f32 %v599, %v609
  %v626 = vadd.f32 %v600, %v609
  %v627 = vadd.f32 %v601, %v609
  %v628 = vadd.f32 %v602, %v609
  %v629 = vadd.f32 %v603, %v609
  %v630 = vadd.f32 %v604, %v609
  %v631 = vadd.f32 %v605, %v609
  %v632 = vadd.f32 %v606, %v609
  %v633 = vadd.f32 %v607, %v609
  %vm634 = vcmask 7168
  %635 = vst.msk [vmem:[%s7] sm:$0xff] %vm634, %v610
  %636 = vst.msk [vmem:[%s7 + $0x8] sm:$0xff] %vm634, %v611
  %637 = vst.msk [vmem:[%s7 + $0x10] sm:$0xff] %vm634, %v612
  %638 = vst.msk [vmem:[%s7 + $0x18] sm:$0xff] %vm634, %v613
  %639 = vst.msk [vmem:[%s7 + $0x20] sm:$0xff] %vm634, %v614
  %640 = vst.msk [vmem:[%s7 + $0x28] sm:$0xff] %vm634, %v615
  %641 = vst.msk [vmem:[%s7 + $0x30] sm:$0xff] %vm634, %v616
  %642 = vst.msk [vmem:[%s7 + $0x38] sm:$0xff] %vm634, %v617
  %643 = vst.msk [vmem:[%s7 + $0x40] sm:$0xff] %vm634, %v618
  %644 = vst.msk [vmem:[%s7 + $0x48] sm:$0xff] %vm634, %v619
  %645 = vst.msk [vmem:[%s7 + $0x50] sm:$0xff] %vm634, %v620
  %646 = vst.msk [vmem:[%s7 + $0x58] sm:$0xff] %vm634, %v621
  %647 = vst.msk [vmem:[%s7 + $0x60] sm:$0xff] %vm634, %v622
  %648 = vst.msk [vmem:[%s7 + $0x68] sm:$0xff] %vm634, %v623
  %649 = vst.msk [vmem:[%s7 + $0x70] sm:$0xff] %vm634, %v624
  %650 = vst.msk [vmem:[%s7 + $0x78] sm:$0xff] %vm634, %v625
  %651 = vst.msk [vmem:[%s7 + $0x80] sm:$0xff] %vm634, %v626
  %652 = vst.msk [vmem:[%s7 + $0x88] sm:$0xff] %vm634, %v627
  %653 = vst.msk [vmem:[%s7 + $0x90] sm:$0xff] %vm634, %v628
  %654 = vst.msk [vmem:[%s7 + $0x98] sm:$0xff] %vm634, %v629
  %655 = vst.msk [vmem:[%s7 + $0xa0] sm:$0xff] %vm634, %v630
  %656 = vst.msk [vmem:[%s7 + $0xa8] sm:$0xff] %vm634, %v631
  %657 = vst.msk [vmem:[%s7 + $0xb0] sm:$0xff] %vm634, %v632
  %658 = vst.msk [vmem:[%s7 + $0xb8] sm:$0xff] %vm634, %v633
  // Predicated region
  $region30: #{mlp_critic_forward.1} parent=0 // pred_check
    _
  $region31: #{mlp_critic_forward.1} parent=0 // pred_check_branch
    %660 = sbr.rel (0) target = $region33
  $region32: #{mlp_critic_forward.1} parent=0 // pred_region
    _
  $region33: #{mlp_critic_forward.1} parent=0 // pred_fallthru
    _
  // Predicated region
  $region34: #{mlp_critic_forward.1} parent=0 // pred_check
    _
  $region35: #{mlp_critic_forward.1} parent=0 // pred_check_branch
    %662 = sbr.rel (0) target = $region37
  $region36: #{mlp_critic_forward.1} parent=0 // pred_region
    _
  $region37: #{mlp_critic_forward.1} parent=0 // pred_fallthru
    _

</llo_original>
